<compile_context>
chip_gen: v7x
topology: tpu7x:2x2x1
jax: 0.10.0
libtpu: 0.0.40
codegen_flags: <defaults>
</compile_context>

<pallas_src>
import jax
import jax.numpy as jnp
from jax.experimental import pallas as pl
from jax.experimental.pallas import tpu as pltpu

S = 4          # pixel-(un)shuffle / area-resample scale used by FrequencyAnalyzer
NG = S * S     # 16 spatial phases per 4x4 block


def _cdiv(a, b):
    return -(-a // b)


def _round_up(a, m):
    return _cdiv(a, m) * m


def _freq_analyzer_kernel(xu_ref, out_ref):
    """One (batch, lane-tile) block.

    xu_ref : (NG, TL)      phase group g = sh*S + sw on sublanes; lane = c*P + p
    out_ref: (NG + 1, TL)  row 0 = low frequency, rows 1..NG = high-freq groups
    """
    x16 = xu_ref[...].astype(jnp.float32)                      # (16, TL)
    # 16-way mean across the sublane axis (XLU reduce), exact 1/16 scaling.
    low = jnp.sum(x16, axis=0, keepdims=True) * (1.0 / NG)     # (1, TL)
    # Row 0 = low, rows 1..16 = x - replicate(low); one full-width aligned store.
    out = jnp.concatenate([low, x16 - low], axis=0)            # (17, TL)
    out_ref[...] = out.astype(out_ref.dtype)


def _lane_tile(L, itemsize, n_batch):
    """Lane-tile along the flattened C*Hs*Ws axis.

    Generation-aware: keep double-buffered in+out blocks <= min(VMEM/4, 16 MiB)
    and guarantee >= 8 total grid steps (pipelining + v7x dual-TC sharding),
    while letting single-TC v5e/v6e take tiles as large as the budget allows.
    """
    try:
        vmem_cap = int(pltpu.get_tpu_info().vmem_capacity_bytes)
    except Exception:
        vmem_cap = 64 * 1024 * 1024                  # v7x per-TC physical; conservative
    budget = max(4 * 1024 * 1024, min(vmem_cap // 4, 16 * 1024 * 1024))

    per_lane = 2 * (2 * NG + 1) * itemsize           # dbl-buffered 16-row in + 17-row out
    tl_vmem = max(128, (budget // per_lane) // 128 * 128)

    steps_per_batch = _cdiv(8, max(1, n_batch))      # >= 8 total steps when data allows
    tl_steps = max(128, _round_up(_cdiv(L, steps_per_batch), 128))

    tl = min(tl_vmem, tl_steps)
    return L if L <= tl else tl                      # full dim OK for tiny feature maps


@jax.jit
def frequency_analyzer_forward(x):
    """x: (N, C, H, W) -> (N, (16+1)*C, H//4, W//4); matches rev=False forward."""
    N, C, H, W = x.shape
    assert H % S == 0 and W % S == 0, (H, W)
    Hs, Ws = H // S, W // S
    P = Hs * Ws
    L = C * P

    # Pixel-unshuffle permutation, channel-group order (sh, sw, c), reshaped so
    # phase groups are a leading (sublane) axis and C*P is the lane axis.
    # Single fused XLA transpose; the surrounding reshapes are free.
    # TODO(synk): fuse this de-interleave into the kernel (needs lane gather).
    xu = jnp.transpose(x.reshape(N, C, Hs, S, Ws, S), (0, 3, 5, 1, 2, 4))
    xu = xu.reshape(N, NG, L)

    TL = _lane_tile(L, x.dtype.itemsize, N)
    # Elementwise along lanes -> partial last tile is safe: padded garbage lanes
    # never feed a lane-direction reduction and their writeback is clipped.
    grid = (N, _cdiv(L, TL))

    cost = pl.CostEstimate(
        flops=2 * NG * N * L,                                   # 16 adds + 16 subs / pos
        transcendentals=0,
        bytes_accessed=N * L * (2 * NG + 1) * x.dtype.itemsize  # read 16C*P, write 17C*P
    )

    out_flat = pl.pallas_call(
        _freq_analyzer_kernel,
        out_shape=jax.ShapeDtypeStruct((N, NG + 1, L), x.dtype),
        grid=grid,
        in_specs=[pl.BlockSpec((None, NG, TL), lambda n, t: (n, 0, t))],
        out_specs=pl.BlockSpec((None, NG + 1, TL), lambda n, t: (n, 0, t)),
        compiler_params=pltpu.CompilerParams(
            dimension_semantics=("parallel", "parallel"),
            vmem_limit_bytes=32 * 1024 * 1024,        # <= scoped/physical on all gens
        ),
        cost_estimate=cost,
    )(xu)

    # Free reshape: (N, 17, C*P) -> (N, 17, C, Hs, Ws) -> (N, 17*C, Hs, Ws),
    # giving channel = k*C + c with k=0 the low band and k=g+1 the unshuffled
    # high band g = sh*S + sw (exactly torch.cat((low, pixel_unshuffle(...)), 1)).
    return out_flat.reshape(N, (NG + 1) * C, Hs, Ws)


def _reference(x):
    """Pure-JAX reference mirroring the PyTorch module (rev=False)."""
    N, C, H, W = x.shape
    Hs, Ws = H // S, W // S
    xr = x.astype(jnp.float32).reshape(N, C, Hs, S, Ws, S)
    low = xr.mean(axis=(3, 5))                                    # area down
    up = jnp.broadcast_to(low[:, :, :, None, :, None], xr.shape)  # area up (replicate)
    high = xr - up
    high_u = jnp.transpose(high, (0, 3, 5, 1, 2, 4)).reshape(N, C * S * S, Hs, Ws)
    return jnp.concatenate([low, high_u], axis=1)


if __name__ == "__main__":
    key = jax.random.PRNGKey(0)
    k1, k2 = jax.random.split(key)

    # Small case matching the module's typical usage (channel_in = 3).
    x_small = jax.random.normal(k1, (2, 3, 16, 16), dtype=jnp.float32)
    out_small = jax.block_until_ready(frequency_analyzer_forward(x_small))
    ref_small = _reference(x_small)
    assert out_small.shape == ref_small.shape, (out_small.shape, ref_small.shape)
    assert jnp.allclose(out_small, ref_small, atol=1e-5, rtol=1e-5), "f32 small mismatch"

    # Larger case exercising the lane-tile grid (L = 3*4096 -> multiple lane tiles).
    x_big = jax.random.normal(k2, (1, 3, 256, 256), dtype=jnp.float32)
    out_big = jax.block_until_ready(frequency_analyzer_forward(x_big))
    ref_big = _reference(x_big)
    assert out_big.shape == ref_big.shape, (out_big.shape, ref_big.shape)
    assert jnp.allclose(out_big, ref_big, atol=1e-5, rtol=1e-5), "f32 big mismatch"

    # bf16 in/out with f32 accumulation inside the kernel.
    x_bf16 = x_small.astype(jnp.bfloat16)
    out_bf16 = jax.block_until_ready(frequency_analyzer_forward(x_bf16))
    ref_bf16 = _reference(x_bf16.astype(jnp.float32))
    assert out_bf16.dtype == jnp.bfloat16
    assert jnp.allclose(out_bf16.astype(jnp.float32), ref_bf16, atol=3e-2, rtol=3e-2), \
        "bf16 mismatch"

    print("KERNEL_OK")
</pallas_src>

<mosaic_0001>
module attributes {stable_mosaic.version = 11 : i64} {
  func.func @_freq_analyzer_kernel(%arg0: i32, %arg1: i32, %arg2: memref<1x16x48xf32, #tpu.memory_space<vmem>>, %arg3: memref<1x17x48xf32, #tpu.memory_space<vmem>>) attributes {dimension_semantics = [#tpu.dimension_semantics<parallel>, #tpu.dimension_semantics<parallel>], iteration_bounds = array<i64: 2, 1>, scalar_prefetch = 0 : i64, scratch_operands = 0 : i64, tpu.core_type = #tpu.core_type<tc>, window_params = [{transform_indices = @transform_0, window_bounds = array<i64: 1, 16, 48>}, {transform_indices = @transform_1, window_bounds = array<i64: 1, 17, 48>}]} {
    %c0 = arith.constant 0 : index
    %c0_0 = arith.constant 0 : index
    %c0_1 = arith.constant 0 : index
    %0 = vector.load %arg2[%c0, %c0_0, %c0_1] : memref<1x16x48xf32, #tpu.memory_space<vmem>>, vector<1x16x48xf32>
    %1 = vector.shape_cast %0 : vector<1x16x48xf32> to vector<16x48xf32>
    %cst = arith.constant dense<0.000000e+00> : vector<48xf32>
    %2 = vector.multi_reduction <add>, %1, %cst [0] : vector<16x48xf32> to vector<48xf32>
    %3 = vector.shape_cast %2 : vector<48xf32> to vector<1x48xf32>
    %cst_2 = arith.constant 6.250000e-02 : f32
    %4 = vector.broadcast %cst_2 : f32 to vector<1x48xf32>
    %5 = arith.mulf %3, %4 : vector<1x48xf32>
    %6 = vector.broadcast %5 : vector<1x48xf32> to vector<16x48xf32>
    %7 = arith.subf %1, %6 : vector<16x48xf32>
    %8 = tpu.concatenate %5, %7 in 0 : vector<1x48xf32>, vector<16x48xf32> -> vector<17x48xf32>
    %c0_3 = arith.constant 0 : index
    %c0_4 = arith.constant 0 : index
    %c0_5 = arith.constant 0 : index
    %9 = vector.load %arg3[%c0_3, %c0_4, %c0_5] : memref<1x17x48xf32, #tpu.memory_space<vmem>>, vector<1x17x48xf32>
    %10 = vector.shape_cast %9 : vector<1x17x48xf32> to vector<17x48xf32>
    %11 = vector.shape_cast %8 : vector<17x48xf32> to vector<1x17x48xf32>
    tpu.vector_store %arg3[%c0_3, %c0_4, %c0_5], %11 {strides = array<i32>} : memref<1x17x48xf32, #tpu.memory_space<vmem>>, vector<1x17x48xf32>,
    return
  }
  func.func @transform_0(%arg0: i32, %arg1: i32) -> (i32, i32, i32) {
    %c0_i32 = arith.constant 0 : i32
    %c0_i32_0 = arith.constant 0 : i32
    return %arg0, %c0_i32, %arg1 : i32, i32, i32
  }
  func.func @transform_1(%arg0: i32, %arg1: i32) -> (i32, i32, i32) {
    %c0_i32 = arith.constant 0 : i32
    %c0_i32_0 = arith.constant 0 : i32
    return %arg0, %c0_i32, %arg1 : i32, i32, i32
  }
}

</mosaic_0001>

<llo_original>
// kernel: frequency_analyzer_forward.1
$region0: #{frequency_analyzer_forward.1}
  #allocation0 [shape = 'u32[]', space=smem, size = 0x4, offset = 0x4, fixed_abs, tag = 'smem constant byte address 0x4 - core index']
  #allocation1 [shape = 'u32[144,128]{1,0:T(1,128)}', space=vmem, size = 0x12000, scoped, tag = 'internal scratch']
  %s0 = inlined_call_operand.vmem [shape: f32[2,16,48], index: 0, kind: input, shape index: {}]
  %s1 = inlined_call_operand.vmem [shape: f32[2,17,48], index: 1, kind: output, shape index: {}]
  %s2 = sld [smem:[#allocation0]]
  $region37: #{frequency_analyzer_forward.1} parent=0
    _
  %s4 = ssub.s32 1, %s2
  %s5 = scalar_select 0, %s4, %s2
  loop: start=0, step=1, limit=4
  $region2: #{frequency_analyzer_forward.1} parent=0 // loop_pre_header
    _
  $region3: #{frequency_analyzer_forward.1} parent=0 // loop_header
    %s7 = sphi 0, %s11
    %p8 = scmp.ge.s32.totalorder %s7, 4
    %s14 = sphi 0, %s26
    %s15 = sphi 0, %s22
    %s16 = sphi 0, %s14
    %s17 = sphi 0, %s15
    %s18 = sphi 0, %s16
    %s19 = sphi 0, %s17
    %s31 = sphi 0, %s33
    %s34 = sphi 0, %s31
    %s35 = sphi 0, %s34
    %s51 = sphi 0, %s35
    %s59 = sphi 0, %s61
    %s62 = sphi 0, %s59
    %s63 = sphi 0, %s62
    %s79 = sphi 0, %s63
  $region4: #{frequency_analyzer_forward.1} parent=0 // loop_header_branch
    %10 = sbr.rel (%p8) target = $region8
  $region5: #{frequency_analyzer_forward.1} parent=0 // loop_body
    %s12 = ssub.s32 %s7, 1
    %s13 = ssub.s32 %s7, 2
    %s20 = sadd.s32 1, %s15
    %p21 = scmp.ge.s32.totalorder %s20, 1
    %s22 = scalar_select %p21, 0, %s20
    %s23 = sadd.s32 1, %s14
    %s24 = scalar_select %p21, %s23, %s14
    %p25 = scmp.ge.s32.totalorder %s24, 2
    %s26 = scalar_select %p25, 0, %s24
    %s27 = ssub.s32 %s14, %s26
    %s28 = ssub.s32 %s15, %s22
    %s29 = sor.u32 %s27, %s28
    %p30 = scmp.eq.s32.totalorder %s29, 0
    %s32 = sadd.s32 %s31, 1
    %s33 = scalar_select %p30, %s31, %s32
    %p36 = pneg %p30
    %p37 = scmp.eq.s32.totalorder %s7, 1
    %p38 = por %p36, %p37
    %p39 = scmp.ne.s32.totalorder %s31, %s34
    %p40 = scmp.eq.s32.totalorder %s7, 0
    %p41 = por %p39, %p40
    %p42 = scmp.ne.s32.totalorder %s31, %s34
    %p43 = scmp.eq.s32.totalorder %s12, 1
    %p44 = por %p42, %p43
    %p45 = scmp.ne.s32.totalorder %s34, %s35
    %p46 = scmp.eq.s32.totalorder %s12, 0
    %p47 = por %p45, %p46
    %p48 = scmp.ne.s32.totalorder %s34, %s35
    %p49 = scmp.eq.s32.totalorder %s13, 1
    %p50 = por %p48, %p49
    %p52 = scmp.ne.s32.totalorder %s35, %s51
    %p53 = scmp.eq.s32.totalorder %s13, 0
    %p54 = por %p52, %p53
    %s55 = ssub.s32 %s14, %s26
    %s56 = ssub.s32 %s15, %s22
    %s57 = sor.u32 %s55, %s56
    %p58 = scmp.eq.s32.totalorder %s57, 0
    %s60 = sadd.s32 %s59, 1
    %s61 = scalar_select %p58, %s59, %s60
    %p64 = pneg %p58
    %p65 = scmp.eq.s32.totalorder %s7, 1
    %p66 = por %p64, %p65
    %p67 = scmp.ne.s32.totalorder %s59, %s62
    %p68 = scmp.eq.s32.totalorder %s7, 0
    %p69 = por %p67, %p68
    %p70 = scmp.ne.s32.totalorder %s59, %s62
    %p71 = scmp.eq.s32.totalorder %s12, 1
    %p72 = por %p70, %p71
    %p73 = scmp.ne.s32.totalorder %s62, %s63
    %p74 = scmp.eq.s32.totalorder %s12, 0
    %p75 = por %p73, %p74
    %p76 = scmp.ne.s32.totalorder %s62, %s63
    %p77 = scmp.eq.s32.totalorder %s13, 1
    %p78 = por %p76, %p77
    %p80 = scmp.ne.s32.totalorder %s63, %s79
    %p81 = scmp.eq.s32.totalorder %s13, 0
    %p82 = por %p80, %p81
    %p83 = scmp.le.s32.totalorder 1, %s7
    %p84 = scmp.lt.s32.totalorder %s7, 3
    %p85 = pnand %p83, %p84
    %p86 = pneg %p85
    // Predicated region
    $region9: #{frequency_analyzer_forward.1} parent=5 // pred_check
      _
    $region10: #{frequency_analyzer_forward.1} parent=5 // pred_check_branch
      %88 = sbr.rel (%p85) target = $region12
    $region11: #{frequency_analyzer_forward.1} parent=5 // pred_region
      %s89 = ssub.s32 %s7, 1
    $region12: #{frequency_analyzer_forward.1} parent=5 // pred_fallthru
      _
    %p90 = scmp.lt.s32.totalorder %s7, 2
    // Predicated region
    $region13: #{frequency_analyzer_forward.1} parent=5 // pred_check
      %p91 = pneg %p90
    $region14: #{frequency_analyzer_forward.1} parent=5 // pred_check_branch
      %93 = sbr.rel (%p91) target = $region16
    $region15: #{frequency_analyzer_forward.1} parent=5 // pred_region
      // Predicated region
      $region17: #{frequency_analyzer_forward.1} parent=15 // pred_check
        %p94 = pneg %p41
      $region18: #{frequency_analyzer_forward.1} parent=15 // pred_check_branch
        %96 = sbr.rel (%p94) target = $region20
      $region19: #{frequency_analyzer_forward.1} parent=15 // pred_region
        %p97 = scmp.lt.s32.totalorder %s14, 1
        %s98 = scalar_select %p97, %s14, 1
        %p99 = scmp.lt.s32.totalorder %s15, 0
        %s100 = scalar_select %p99, %s15, 0
        %s101 = smul.addr %s98, 2
        %s102 = sadd.s32 %s100, %s101
        %s103 = smul.addr %s102, 8
        %s104 = scalar_lea.vmem %s0, %s103
      $region20: #{frequency_analyzer_forward.1} parent=15 // pred_fallthru
        _
    $region16: #{frequency_analyzer_forward.1} parent=5 // pred_fallthru
      _
    %p105 = scmp.le.s32.totalorder 1, %s7
    %p106 = scmp.lt.s32.totalorder %s7, 3
    %p107 = pnand %p105, %p106
    %p108 = pneg %p107
    // Predicated region
    $region21: #{frequency_analyzer_forward.1} parent=5 // pred_check
      _
    $region22: #{frequency_analyzer_forward.1} parent=5 // pred_check_branch
      %110 = sbr.rel (%p107) target = $region24
    $region23: #{frequency_analyzer_forward.1} parent=5 // pred_region
      %s111 = ssub.s32 %s7, 1
      %p112 = scmp.lt.s32.totalorder %s16, 1
      %s113 = scalar_select %p112, %s16, 1
      %p114 = scmp.lt.s32.totalorder %s17, 0
      %s115 = scalar_select %p114, %s17, 0
      %s116 = smul.addr %s113, 2
      %s117 = sadd.s32 %s115, %s116
      %s118 = smul.addr %s117, 8
      %s119 = scalar_lea.vmem %s0, %s118
      %p120 = pneg %p47
      %p121 = pneg %p44
      %p122 = pneg %p75
      %p123 = pneg %p72
      %p124 = scmp.lt.s32.totalorder %s16, 1
      %s125 = scalar_select %p124, %s16, 1
      %p126 = scmp.lt.s32.totalorder %s17, 0
      %s127 = scalar_select %p126, %s17, 0
      %s128 = smul.addr %s125, 3
      %s129 = sadd.s32 %s127, %s128
      %s130 = smul.addr %s129, 8
      %s131 = scalar_lea.vmem %s1, %s130
      %p132 = scmp.lt.s32.totalorder %s16, 1
      %s133 = scalar_select %p132, %s16, 1
      %p134 = scmp.lt.s32.totalorder %s17, 0
      %s135 = scalar_select %p134, %s17, 0
      %s136 = smul.addr %s133, 2
      %s137 = sadd.s32 %s135, %s136
      %s138 = smul.addr %s137, 8
      %s139 = scalar_lea.vmem %s0, %s138
      %p140 = scmp.lt.s32.totalorder %s16, 1
      %s141 = scalar_select %p140, %s16, 1
      %p142 = scmp.lt.s32.totalorder %s17, 0
      %s143 = scalar_select %p142, %s17, 0
      %s144 = smul.addr %s141, 3
      %s145 = sadd.s32 %s143, %s144
      %s146 = smul.addr %s145, 8
      %s147 = scalar_lea.vmem %s1, %s146
      %v148 = vld [vmem:[%s139] sm:$0xff]
      %v149 = vld [vmem:[%s139 + $0x8] sm:$0xff]
      %vm150 = vcmask 392192
      %v151 = vsel %vm150, %v148, 0.0
      %v152 = vsel %vm150, %v149, 0.0
      %v153 = vadd.f32 %v151, %v152
      %v154 = vrot.slane %v153, 4
      %v155 = vadd.f32 %v153, %v154
      %v156 = vrot.slane %v155, 2
      %v157 = vadd.f32 %v155, %v156
      %v158 = vrot.slane %v157, 1
      %v159 = vadd.f32 %v157, %v158
      %v160 = vmul.f32 %v159, 0.0625
      %v161 = vsub.f32 %v148, %v160
      %v162 = vsub.f32 %v149, %v160
      %vm165 = vcmask 1040384
      %v166 = vrot.slane %v161, 7
      %v167 = vrot.slane %v162, 7
      %v168 = vsel %vm165, %v166, %v167
      %v172 = vsel %vm165, %v160, %v166
      %173 = vst.msk [vmem:[%s147] sm:$0xff] %vm150, %v172
      %174 = vst.msk [vmem:[%s147 + $0x8] sm:$0xff] %vm150, %v168
      %vm175 = vcmask 385024
      %176 = vst.msk [vmem:[%s147 + $0x10] sm:$0x1] %vm175, %v167
      %p177 = scmp.lt.s32.totalorder %s16, 1
      %s178 = scalar_select %p177, %s16, 1
      %p179 = scmp.lt.s32.totalorder %s17, 0
      %s180 = scalar_select %p179, %s17, 0
      %s181 = smul.addr %s178, 3
      %s182 = sadd.s32 %s180, %s181
      %s183 = smul.addr %s182, 8
      %s184 = scalar_lea.vmem %s1, %s183
      // Predicated region
      $region25: #{frequency_analyzer_forward.1} parent=23 // pred_check
        %p185 = pneg %p72
      $region26: #{frequency_analyzer_forward.1} parent=23 // pred_check_branch
        %187 = sbr.rel (%p185) target = $region28
      $region27: #{frequency_analyzer_forward.1} parent=23 // pred_region
        _
      $region28: #{frequency_analyzer_forward.1} parent=23 // pred_fallthru
        _
    $region24: #{frequency_analyzer_forward.1} parent=5 // pred_fallthru
      _
    %p188 = scmp.le.s32.totalorder 2, %s7
    // Predicated region
    $region29: #{frequency_analyzer_forward.1} parent=5 // pred_check
      %p189 = pneg %p188
    $region30: #{frequency_analyzer_forward.1} parent=5 // pred_check_branch
      %191 = sbr.rel (%p189) target = $region32
    $region31: #{frequency_analyzer_forward.1} parent=5 // pred_region
      %s192 = ssub.s32 %s7, 2
      // Predicated region
      $region33: #{frequency_analyzer_forward.1} parent=31 // pred_check
        %p193 = pneg %p78
      $region34: #{frequency_analyzer_forward.1} parent=31 // pred_check_branch
        %195 = sbr.rel (%p193) target = $region36
      $region35: #{frequency_analyzer_forward.1} parent=31 // pred_region
        %p196 = scmp.lt.s32.totalorder %s18, 1
        %s197 = scalar_select %p196, %s18, 1
        %p198 = scmp.lt.s32.totalorder %s19, 0
        %s199 = scalar_select %p198, %s19, 0
        %s200 = smul.addr %s197, 3
        %s201 = sadd.s32 %s199, %s200
        %s202 = smul.addr %s201, 8
        %s203 = scalar_lea.vmem %s1, %s202
      $region36: #{frequency_analyzer_forward.1} parent=31 // pred_fallthru
        _
    $region32: #{frequency_analyzer_forward.1} parent=5 // pred_fallthru
      _
  $region6: #{frequency_analyzer_forward.1} parent=0 // loop_footer
    %s11 = sadd.s32 1, %s7
  $region7: #{frequency_analyzer_forward.1} parent=0 // loop_footer_branch
    %6 = sbr.rel target = $region3
  $region8: #{frequency_analyzer_forward.1} parent=0 // loop_exit
    _

</llo_original>
